<compile_context>
chip_gen: v7x
topology: tpu7x:2x2x1
jax: 0.10.0
libtpu: 0.0.40
codegen_flags: <defaults>
</compile_context>

<pallas_src>
import functools
import math

import jax
import jax.numpy as jnp
from jax.experimental import pallas as pl
from jax.experimental.pallas import tpu as pltpu

_MASK_FILL = -1.0e6    # matches d2l masked_softmax fill value
_PAD_FILL = -1.0e30    # excludes wrapper-added key padding exactly


def _online_softmax_step(q, k, v, vl, ki, nk, o_ref, m_sc, l_sc, acc_sc, *,
                         scale, tk, k_orig, k_padded, need_mask):
    """One (tq, tk) tile of flash attention. q:(tq,D) k:(D,tk) v:(tk,Dv)."""

    @pl.when(ki == 0)
    def _():
        m_sc[...] = jnp.full_like(m_sc, -jnp.inf)
        l_sc[...] = jnp.zeros_like(l_sc)
        acc_sc[...] = jnp.zeros_like(acc_sc)

    # Fold the 1/sqrt(d) scale into the small (tq, D) q tile, then a plain
    # row-major matmul on the MXU with f32 accumulation (K pre-transposed).
    qs = q * jnp.asarray(scale, dtype=q.dtype)
    s = jax.lax.dot_general(qs, k, (((1,), (0,)), ((), ())),
                            preferred_element_type=jnp.float32)   # (tq, tk) f32

    if need_mask or (k_padded > k_orig):
        col = ki * tk + jax.lax.broadcasted_iota(jnp.int32, s.shape, 1)
        if need_mask:
            s = jnp.where(col < vl, s, _MASK_FILL)          # PyTorch fill value
        if k_padded > k_orig:
            s = jnp.where(col < k_orig, s, _PAD_FILL)        # drop pad columns

    # Online softmax update.
    m_prev = m_sc[...]
    m_new = jnp.maximum(m_prev, jnp.max(s, axis=-1, keepdims=True))
    alpha = jnp.exp(m_prev - m_new)
    p = jnp.exp(s - m_new)
    l_sc[...] = alpha * l_sc[...] + jnp.sum(p, axis=-1, keepdims=True)
    acc_sc[...] = alpha * acc_sc[...] + jax.lax.dot_general(
        p.astype(v.dtype), v, (((1,), (0,)), ((), ())),
        preferred_element_type=jnp.float32)
    m_sc[...] = m_new

    @pl.when(ki == nk - 1)
    def _():
        # Deferred normalization: one reciprocal + (tq, Dv) multiply instead of
        # (tq, K) divides.
        inv = pl.reciprocal(l_sc[...], approx=False)
        o_ref[0] = (acc_sc[...] * inv).astype(o_ref.dtype)


def _attn_kernel_scalar_vl(vl_sref, q_ref, k_ref, v_ref, o_ref,
                           m_sc, l_sc, acc_sc, *,
                           scale, tk, k_orig, k_padded, need_mask):
    """valid_lens is per-batch: one SMEM scalar read per grid step."""
    ki = pl.program_id(2)
    vl = vl_sref[pl.program_id(0)] if need_mask else 0
    _online_softmax_step(q_ref[0], k_ref[0], v_ref[0], vl, ki,
                         pl.num_programs(2), o_ref, m_sc, l_sc, acc_sc,
                         scale=scale, tk=tk, k_orig=k_orig, k_padded=k_padded,
                         need_mask=need_mask)


def _attn_kernel_row_vl(vl_ref, q_ref, k_ref, v_ref, o_ref,
                        m_sc, l_sc, acc_sc, *,
                        scale, tk, k_orig, k_padded):
    """valid_lens is per-row (B, Q): (tq, 1) int32 VMEM block."""
    ki = pl.program_id(2)
    _online_softmax_step(q_ref[0], k_ref[0], v_ref[0], vl_ref[0], ki,
                         pl.num_programs(2), o_ref, m_sc, l_sc, acc_sc,
                         scale=scale, tk=tk, k_orig=k_orig, k_padded=k_padded,
                         need_mask=True)


def _round_up(x, m):
    return ((x + m - 1) // m) * m


def dot_product_attention(queries, keys, values, valid_lens=None, *,
                          tq=None, tk=None):
    """queries: (B, Q, D), keys: (B, K, D), values: (B, K, Dv).

    valid_lens: None, (B,) or (B, Q) -- same convention as the PyTorch module.
    Returns (B, Q, Dv).
    """
    B, Q, D = queries.shape
    _, K, _ = keys.shape
    Dv = values.shape[-1]
    scale = 1.0 / math.sqrt(D)       # scale uses the true feature dim

    SUB, LANE = 8, 128

    # Query tile: multiple of 8 sublanes.
    if tq is None:
        tq = min(256, _round_up(Q, SUB))
    tq = max(SUB, _round_up(tq, SUB))
    Qp = _round_up(Q, tq)

    # Key tile: single full tile for short sequences, otherwise 512 (v5e users
    # can pass tk=256).  Multi-tile key blocks must be 128-lane aligned because
    # K is fed transposed (key axis is the lane axis of the K tile).
    if tk is None:
        tk = _round_up(K, SUB) if K <= 512 else 512
    else:
        tk = max(SUB, _round_up(tk, SUB))
    Kp = _round_up(K, tk)
    if Kp > tk:
        tk = _round_up(tk, LANE)
        Kp = _round_up(K, tk)
    nq, nk = Qp // tq, Kp // tk

    # Only the query / key axes are padded; head dims stay unpadded.
    qp = queries if Qp == Q else jnp.pad(queries, ((0, 0), (0, Qp - Q), (0, 0)))
    kT = jnp.swapaxes(keys, 1, 2)                                  # (B, D, K)
    kT = kT if Kp == K else jnp.pad(kT, ((0, 0), (0, 0), (0, Kp - K)))
    vp = values if Kp == K else jnp.pad(values, ((0, 0), (0, Kp - K), (0, 0)))

    itemsize = jnp.dtype(queries.dtype).itemsize
    block_bytes = (tq * D + D * tk + tk * Dv + tq * Dv) * itemsize
    scratch_bytes = (2 * tq + tq * Dv) * 4
    # 2-deep buffering on every block + scratch + headroom, clamped to stay
    # comfortably inside v7x's 64 MiB physical VMEM.
    vmem_limit = int(min(max(4 * block_bytes + scratch_bytes + (4 << 20),
                             16 << 20), 40 << 20))

    q_spec = pl.BlockSpec((1, tq, D), lambda b, qi, ki, *_: (b, qi, 0))
    k_spec = pl.BlockSpec((1, D, tk), lambda b, qi, ki, *_: (b, 0, ki))
    v_spec = pl.BlockSpec((1, tk, Dv), lambda b, qi, ki, *_: (b, ki, 0))
    o_spec = pl.BlockSpec((1, tq, Dv), lambda b, qi, ki, *_: (b, qi, 0))
    scratch = [pltpu.VMEM((tq, 1), jnp.float32),     # running max m
               pltpu.VMEM((tq, 1), jnp.float32),     # running denom l
               pltpu.VMEM((tq, Dv), jnp.float32)]    # f32 output accumulator

    cost = pl.CostEstimate(
        flops=2 * B * Qp * Kp * (D + Dv),
        transcendentals=B * Qp * Kp,
        bytes_accessed=itemsize * (B * Qp * D + B * nq * Kp * (D + Dv)
                                   + B * Qp * Dv),
    )
    common = dict(
        out_shape=jax.ShapeDtypeStruct((B, Qp, Dv), queries.dtype),
        compiler_params=pltpu.CompilerParams(
            dimension_semantics=("parallel", "parallel", "arbitrary"),
            vmem_limit_bytes=vmem_limit),
        cost_estimate=cost,
    )

    # NOTE(perf): on v6e/v7x, casting f32 q/k/p/v tiles to bf16 before the two
    # matmuls (keeping f32 accumulation) is ~4x MXU throughput; kept off here to
    # stay bit-faithful to the f32 PyTorch reference.

    if valid_lens is None or valid_lens.ndim == 1:
        # Per-batch valid lens -> scalar prefetch into SMEM.
        need_mask = valid_lens is not None
        if need_mask:
            vl1 = valid_lens.astype(jnp.int32).reshape(B)
        else:
            vl1 = jnp.full((B,), K, dtype=jnp.int32)
        kernel = functools.partial(
            _attn_kernel_scalar_vl, scale=scale, tk=tk,
            k_orig=K, k_padded=Kp, need_mask=need_mask)
        out = pl.pallas_call(
            kernel,
            grid_spec=pltpu.PrefetchScalarGridSpec(
                num_scalar_prefetch=1,
                grid=(B, nq, nk),
                in_specs=[q_spec, k_spec, v_spec],
                out_specs=o_spec,
                scratch_shapes=scratch),
            **common,
        )(vl1, qp, kT, vp)
    else:
        # Per-row valid lens -> small (1, tq, 1) VMEM block.
        vl = valid_lens.astype(jnp.int32).reshape(B, Q)
        if Qp > Q:
            vl = jnp.pad(vl, ((0, 0), (0, Qp - Q)), constant_values=K)
        vl = vl.reshape(B, Qp, 1)
        vl_spec = pl.BlockSpec((1, tq, 1), lambda b, qi, ki: (b, qi, 0))
        kernel = functools.partial(
            _attn_kernel_row_vl, scale=scale, tk=tk, k_orig=K, k_padded=Kp)
        out = pl.pallas_call(
            kernel,
            grid_spec=pltpu.PrefetchScalarGridSpec(
                num_scalar_prefetch=0,
                grid=(B, nq, nk),
                in_specs=[vl_spec, q_spec, k_spec, v_spec],
                out_specs=o_spec,
                scratch_shapes=scratch),
            **common,
        )(vl, qp, kT, vp)

    return out[:, :Q, :]


if __name__ == "__main__":
    key = jax.random.PRNGKey(0)
    kq, kk, kv, kk2, kv2 = jax.random.split(key, 5)

    B, Q, K, D, Dv = 2, 8, 16, 32, 32
    q = jax.random.normal(kq, (B, Q, D), dtype=jnp.float32)
    k = jax.random.normal(kk, (B, K, D), dtype=jnp.float32)
    v = jax.random.normal(kv, (B, K, Dv), dtype=jnp.float32)

    def ref_attn(q, k, v, vl_rows):
        d = q.shape[-1]
        kk_ = k.shape[1]
        scores = jnp.einsum("bqd,bkd->bqk", q, k) / math.sqrt(d)
        if vl_rows is not None:
            mask = jnp.arange(kk_)[None, None, :] < vl_rows[:, :, None]
            scores = jnp.where(mask, scores, -1e6)
        w = jax.nn.softmax(scores, axis=-1)
        return jnp.einsum("bqk,bkd->bqd", w, v)

    # (B,) valid_lens -> scalar-prefetch path.
    valid_lens = jnp.array([3, 12], dtype=jnp.int32)
    out = jax.block_until_ready(dot_product_attention(q, k, v, valid_lens))
    ref = ref_attn(q, k, v, jnp.broadcast_to(valid_lens[:, None], (B, Q)))
    assert out.shape == (B, Q, Dv)
    assert jnp.allclose(out, ref, atol=1e-4, rtol=1e-4)

    # valid_lens=None -> plain softmax.
    out2 = jax.block_until_ready(dot_product_attention(q, k, v, None))
    ref2 = ref_attn(q, k, v, None)
    assert jnp.allclose(out2, ref2, atol=1e-4, rtol=1e-4)

    # (B, Q) valid_lens -> per-row VMEM path.
    vl2d = jnp.broadcast_to(jnp.arange(1, Q + 1, dtype=jnp.int32)[None, :], (B, Q))
    out3 = jax.block_until_ready(dot_product_attention(q, k, v, vl2d))
    ref3 = ref_attn(q, k, v, vl2d)
    assert jnp.allclose(out3, ref3, atol=1e-4, rtol=1e-4)

    # Longer keys -> multiple k-tiles (exercises the online-softmax carry),
    # including a fully-masked row (valid_len == 0).
    K2 = 256
    k_long = jax.random.normal(kk2, (B, K2, D), dtype=jnp.float32)
    v_long = jax.random.normal(kv2, (B, K2, Dv), dtype=jnp.float32)
    vl_long = jnp.array([0, 200], dtype=jnp.int32)
    out4 = jax.block_until_ready(
        dot_product_attention(q, k_long, v_long, vl_long, tk=128))
    ref4 = ref_attn(q, k_long, v_long,
                    jnp.broadcast_to(vl_long[:, None], (B, Q)))
    assert jnp.allclose(out4, ref4, atol=1e-4, rtol=1e-4)

    print("KERNEL_OK")
</pallas_src>

<mosaic_0001>
module attributes {stable_mosaic.version = 11 : i64} {
  func.func @_attn_kernel_scalar_vl(%arg0: i32, %arg1: i32, %arg2: i32, %arg3: memref<2xi32, #tpu.memory_space<smem>>, %arg4: memref<1x8x32xf32, #tpu.memory_space<vmem>>, %arg5: memref<1x32x16xf32, #tpu.memory_space<vmem>>, %arg6: memref<1x16x32xf32, #tpu.memory_space<vmem>>, %arg7: memref<1x8x32xf32, #tpu.memory_space<vmem>>, %arg8: memref<8x1xf32, #tpu.memory_space<vmem>>, %arg9: memref<8x1xf32, #tpu.memory_space<vmem>>, %arg10: memref<8x32xf32, #tpu.memory_space<vmem>>) attributes {dimension_semantics = [#tpu.dimension_semantics<parallel>, #tpu.dimension_semantics<parallel>, #tpu.dimension_semantics<arbitrary>], iteration_bounds = array<i64: 2, 1, 1>, scalar_prefetch = 1 : i64, scratch_operands = 3 : i64, tpu.core_type = #tpu.core_type<tc>, window_params = [{transform_indices = @transform_0, window_bounds = array<i64: 1, 8, 32>}, {transform_indices = @transform_1, window_bounds = array<i64: 1, 32, 16>}, {transform_indices = @transform_2, window_bounds = array<i64: 1, 16, 32>}, {transform_indices = @transform_3, window_bounds = array<i64: 1, 8, 32>}]} {
    %0 = arith.index_cast %arg0 : i32 to index
    %1 = memref.load %arg3[%0] : memref<2xi32, #tpu.memory_space<smem>>
    %c0 = arith.constant 0 : index
    %c0_0 = arith.constant 0 : index
    %c0_1 = arith.constant 0 : index
    %2 = vector.load %arg4[%c0, %c0_0, %c0_1] : memref<1x8x32xf32, #tpu.memory_space<vmem>>, vector<1x8x32xf32>
    %3 = vector.shape_cast %2 : vector<1x8x32xf32> to vector<8x32xf32>
    %c0_2 = arith.constant 0 : index
    %c0_3 = arith.constant 0 : index
    %c0_4 = arith.constant 0 : index
    %4 = vector.load %arg5[%c0_2, %c0_3, %c0_4] : memref<1x32x16xf32, #tpu.memory_space<vmem>>, vector<1x32x16xf32>
    %5 = vector.shape_cast %4 : vector<1x32x16xf32> to vector<32x16xf32>
    %c0_5 = arith.constant 0 : index
    %c0_6 = arith.constant 0 : index
    %c0_7 = arith.constant 0 : index
    %6 = vector.load %arg6[%c0_5, %c0_6, %c0_7] : memref<1x16x32xf32, #tpu.memory_space<vmem>>, vector<1x16x32xf32>
    %7 = vector.shape_cast %6 : vector<1x16x32xf32> to vector<16x32xf32>
    %c0_i32 = arith.constant 0 : i32
    %8 = arith.cmpi eq, %arg2, %c0_i32 : i32
    %9 = arith.extui %8 : i1 to i32
    %c0_i32_8 = arith.constant 0 : i32
    %10 = arith.cmpi ne, %9, %c0_i32_8 : i32
    scf.if %10 {
      %cst_28 = arith.constant 0xFF800000 : f32
      %47 = vector.broadcast %cst_28 : f32 to vector<8x1xf32>
      %c0_29 = arith.constant 0 : index
      %c0_30 = arith.constant 0 : index
      %48 = vector.load %arg8[%c0_29, %c0_30] : memref<8x1xf32, #tpu.memory_space<vmem>>, vector<8x1xf32>
      tpu.vector_store %arg8[%c0_29, %c0_30], %47 {strides = array<i32>} : memref<8x1xf32, #tpu.memory_space<vmem>>, vector<8x1xf32>,
      %cst_31 = arith.constant 0.000000e+00 : f32
      %49 = vector.broadcast %cst_31 : f32 to vector<8x1xf32>
      %c0_32 = arith.constant 0 : index
      %c0_33 = arith.constant 0 : index
      %50 = vector.load %arg9[%c0_32, %c0_33] : memref<8x1xf32, #tpu.memory_space<vmem>>, vector<8x1xf32>
      tpu.vector_store %arg9[%c0_32, %c0_33], %49 {strides = array<i32>} : memref<8x1xf32, #tpu.memory_space<vmem>>, vector<8x1xf32>,
      %cst_34 = arith.constant 0.000000e+00 : f32
      %51 = vector.broadcast %cst_34 : f32 to vector<8x32xf32>
      %c0_35 = arith.constant 0 : index
      %c0_36 = arith.constant 0 : index
      %52 = vector.load %arg10[%c0_35, %c0_36] : memref<8x32xf32, #tpu.memory_space<vmem>>, vector<8x32xf32>
      tpu.vector_store %arg10[%c0_35, %c0_36], %51 {strides = array<i32>} : memref<8x32xf32, #tpu.memory_space<vmem>>, vector<8x32xf32>,
    } else {
    }
    %cst = arith.constant 0.176776692 : f32
    %11 = vector.broadcast %cst : f32 to vector<8x32xf32>
    %12 = arith.mulf %3, %11 : vector<8x32xf32>
    %cst_9 = arith.constant dense<0.000000e+00> : vector<8x16xf32>
    %13 = tpu.matmul %12, %5, %cst_9 {dimension_numbers = #tpu.dot_dimension_numbers<[1], [0], [0], [1], [0, 0, 1, 1], [], []>} : vector<8x32xf32>, vector<32x16xf32>, vector<8x16xf32> -> vector<8x16xf32>
    %c16_i32 = arith.constant 16 : i32
    %14 = arith.muli %arg2, %c16_i32 : i32
    %15 = tpu.iota {dimensions = array<i32: 1>} : vector<8x16xi32>
    %16 = vector.broadcast %14 : i32 to vector<8x16xi32>
    %17 = arith.addi %16, %15 : vector<8x16xi32>
    %18 = vector.broadcast %1 : i32 to vector<8x16xi32>
    %19 = arith.cmpi slt, %17, %18 : vector<8x16xi32>
    %cst_10 = arith.constant -1.000000e+06 : f32
    %20 = vector.broadcast %cst_10 : f32 to vector<8x16xf32>
    %21 = arith.select %19, %13, %20 : vector<8x16xi1>, vector<8x16xf32>
    %c0_11 = arith.constant 0 : index
    %c0_12 = arith.constant 0 : index
    %22 = vector.load %arg8[%c0_11, %c0_12] : memref<8x1xf32, #tpu.memory_space<vmem>>, vector<8x1xf32>
    %cst_13 = arith.constant dense<0xFF800000> : vector<8xf32>
    %23 = vector.multi_reduction <maximumf>, %21, %cst_13 [1] : vector<8x16xf32> to vector<8xf32>
    %24 = vector.shape_cast %23 : vector<8xf32> to vector<8x1xf32>
    %25 = arith.maximumf %22, %24 : vector<8x1xf32>
    %26 = arith.subf %22, %25 : vector<8x1xf32>
    %27 = math.exp %26 : vector<8x1xf32>
    %28 = vector.broadcast %25 : vector<8x1xf32> to vector<8x16xf32>
    %29 = arith.subf %21, %28 : vector<8x16xf32>
    %30 = math.exp %29 : vector<8x16xf32>
    %c0_14 = arith.constant 0 : index
    %c0_15 = arith.constant 0 : index
    %31 = vector.load %arg9[%c0_14, %c0_15] : memref<8x1xf32, #tpu.memory_space<vmem>>, vector<8x1xf32>
    %32 = arith.mulf %27, %31 : vector<8x1xf32>
    %cst_16 = arith.constant dense<0.000000e+00> : vector<8xf32>
    %33 = vector.multi_reduction <add>, %30, %cst_16 [1] : vector<8x16xf32> to vector<8xf32>
    %34 = vector.shape_cast %33 : vector<8xf32> to vector<8x1xf32>
    %35 = arith.addf %32, %34 : vector<8x1xf32>
    %c0_17 = arith.constant 0 : index
    %c0_18 = arith.constant 0 : index
    %36 = vector.load %arg9[%c0_17, %c0_18] : memref<8x1xf32, #tpu.memory_space<vmem>>, vector<8x1xf32>
    tpu.vector_store %arg9[%c0_17, %c0_18], %35 {strides = array<i32>} : memref<8x1xf32, #tpu.memory_space<vmem>>, vector<8x1xf32>,
    %c0_19 = arith.constant 0 : index
    %c0_20 = arith.constant 0 : index
    %37 = vector.load %arg10[%c0_19, %c0_20] : memref<8x32xf32, #tpu.memory_space<vmem>>, vector<8x32xf32>
    %38 = vector.broadcast %27 : vector<8x1xf32> to vector<8x32xf32>
    %39 = arith.mulf %38, %37 : vector<8x32xf32>
    %cst_21 = arith.constant dense<0.000000e+00> : vector<8x32xf32>
    %40 = tpu.matmul %30, %7, %cst_21 {dimension_numbers = #tpu.dot_dimension_numbers<[1], [0], [0], [1], [0, 0, 1, 1], [], []>} : vector<8x16xf32>, vector<16x32xf32>, vector<8x32xf32> -> vector<8x32xf32>
    %41 = arith.addf %39, %40 : vector<8x32xf32>
    %c0_22 = arith.constant 0 : index
    %c0_23 = arith.constant 0 : index
    %42 = vector.load %arg10[%c0_22, %c0_23] : memref<8x32xf32, #tpu.memory_space<vmem>>, vector<8x32xf32>
    tpu.vector_store %arg10[%c0_22, %c0_23], %41 {strides = array<i32>} : memref<8x32xf32, #tpu.memory_space<vmem>>, vector<8x32xf32>,
    %c0_24 = arith.constant 0 : index
    %c0_25 = arith.constant 0 : index
    %43 = vector.load %arg8[%c0_24, %c0_25] : memref<8x1xf32, #tpu.memory_space<vmem>>, vector<8x1xf32>
    tpu.vector_store %arg8[%c0_24, %c0_25], %25 {strides = array<i32>} : memref<8x1xf32, #tpu.memory_space<vmem>>, vector<8x1xf32>,
    %c0_i32_26 = arith.constant 0 : i32
    %44 = arith.cmpi eq, %arg2, %c0_i32_26 : i32
    %45 = arith.extui %44 : i1 to i32
    %c0_i32_27 = arith.constant 0 : i32
    %46 = arith.cmpi ne, %45, %c0_i32_27 : i32
    scf.if %46 {
      %c0_28 = arith.constant 0 : index
      %c0_29 = arith.constant 0 : index
      %47 = vector.load %arg9[%c0_28, %c0_29] : memref<8x1xf32, #tpu.memory_space<vmem>>, vector<8x1xf32>
      %48 = tpu.reciprocal %47 : vector<8x1xf32> -> vector<8x1xf32>
      %c0_30 = arith.constant 0 : index
      %c0_31 = arith.constant 0 : index
      %49 = vector.load %arg10[%c0_30, %c0_31] : memref<8x32xf32, #tpu.memory_space<vmem>>, vector<8x32xf32>
      %50 = vector.broadcast %48 : vector<8x1xf32> to vector<8x32xf32>
      %51 = arith.mulf %49, %50 : vector<8x32xf32>
      %c0_32 = arith.constant 0 : index
      %c0_33 = arith.constant 0 : index
      %c0_34 = arith.constant 0 : index
      %52 = vector.load %arg7[%c0_32, %c0_33, %c0_34] : memref<1x8x32xf32, #tpu.memory_space<vmem>>, vector<1x8x32xf32>
      %53 = vector.shape_cast %52 : vector<1x8x32xf32> to vector<8x32xf32>
      %54 = vector.shape_cast %51 : vector<8x32xf32> to vector<1x8x32xf32>
      tpu.vector_store %arg7[%c0_32, %c0_33, %c0_34], %54 {strides = array<i32>} : memref<1x8x32xf32, #tpu.memory_space<vmem>>, vector<1x8x32xf32>,
    } else {
    }
    return
  }
  func.func @transform_0(%arg0: i32, %arg1: i32, %arg2: i32, %arg3: memref<2xi32, #tpu.memory_space<smem>>) -> (i32, i32, i32) {
    %c0_i32 = arith.constant 0 : i32
    %c0_i32_0 = arith.constant 0 : i32
    return %arg0, %arg1, %c0_i32 : i32, i32, i32
  }
  func.func @transform_1(%arg0: i32, %arg1: i32, %arg2: i32, %arg3: memref<2xi32, #tpu.memory_space<smem>>) -> (i32, i32, i32) {
    %c0_i32 = arith.constant 0 : i32
    %c0_i32_0 = arith.constant 0 : i32
    return %arg0, %c0_i32, %arg2 : i32, i32, i32
  }
  func.func @transform_2(%arg0: i32, %arg1: i32, %arg2: i32, %arg3: memref<2xi32, #tpu.memory_space<smem>>) -> (i32, i32, i32) {
    %c0_i32 = arith.constant 0 : i32
    %c0_i32_0 = arith.constant 0 : i32
    return %arg0, %arg2, %c0_i32 : i32, i32, i32
  }
  func.func @transform_3(%arg0: i32, %arg1: i32, %arg2: i32, %arg3: memref<2xi32, #tpu.memory_space<smem>>) -> (i32, i32, i32) {
    %c0_i32 = arith.constant 0 : i32
    %c0_i32_0 = arith.constant 0 : i32
    return %arg0, %arg1, %c0_i32 : i32, i32, i32
  }
}

</mosaic_0001>

<llo_original>
// kernel: tpu_custom_call.1
$region0: #{tpu_custom_call.1}
  #allocation0 [shape = 'u32[]', space=smem, size = 0x4, offset = 0x4, fixed_abs, tag = 'smem constant byte address 0x4 - core index']
  #allocation1 [shape = 'u32[144,128]{1,0:T(1,128)}', space=vmem, size = 0x12000, scoped, tag = 'internal scratch']
  #allocation2 [shape = 'f32[8,1]{1,0:T(8,128)}', space=vmem, size = 0x1000, scoped, tag = 'scratch operand']
  #allocation3 [shape = 'f32[8,1]{1,0:T(8,128)}', space=vmem, size = 0x1000, scoped, tag = 'scratch operand']
  #allocation4 [shape = 'f32[8,32]{1,0:T(8,128)}', space=vmem, size = 0x1000, scoped, tag = 'scratch operand']
  #allocation5 [shape = 's32[1]{0}', space=sflag, size = 0x4, scoped, tag = 'scoped memory for tpu_custom_call.1']
  #allocation6 [shape = 'u8[512]{0}', space=smem, size = 0x200, scoped, tag = 'prefetched SMEM operand 0']
  %s0 = inlined_call_operand.vmem [shape: s32[2], index: 0, kind: input, shape index: {}]
  %s1 = inlined_call_operand.vmem [shape: f32[2,8,32], index: 1, kind: input, shape index: {}]
  %s2 = inlined_call_operand.vmem [shape: f32[2,32,16], index: 2, kind: input, shape index: {}]
  %s3 = inlined_call_operand.vmem [shape: f32[2,16,32], index: 3, kind: input, shape index: {}]
  %s4 = inlined_call_operand.hbm [shape: f32[2,8,32], index: 4, kind: output, shape index: {}]
  %s5 = sld [smem:[#allocation0]]
  $region53: #{tpu_custom_call.1} parent=0
    _
  %s7 = ssub.s32 1, %s5
  %s8 = scalar_select 0, %s7, %s5
  %s9 = sshll.u32 %s0, 4
  %s10 = int_to_ptr.vmem [resolvable:$true] %s9
  %12 = dma.vmem_to_smem %s10, 16, [#allocation6], [#allocation5]
  %13 = dma.done [#allocation5], 16
  %14 = sfence
  $region1: #{tpu_custom_call.1} parent=0
    #allocation7 [shape = 'u8[8192]{0}', space=vmem, size = 0x2000, scoped, tag = 'output window, operand 0']
    #allocation8 [shape = 's32[2]{0}', space=sflag, size = 0x8, scoped, tag = 'scoped memory for tpu_custom_call.1']
    %15 = vsyncpa [#allocation8], 0
    %s16 = scalar_lea.sflag [#allocation8], 1
    %17 = vsyncpa %s16, 0
    loop: start=0, step=1, limit=4
    $region2: #{tpu_custom_call.1} parent=1 // loop_pre_header
      _
    $region3: #{tpu_custom_call.1} parent=1 // loop_header
      %s19 = sphi 0, %s23
      %p20 = scmp.ge.s32.totalorder %s19, 4
      %s26 = sphi 0, %s45
      %s27 = sphi 0, %s41
      %s28 = sphi 0, %s37
      %s29 = sphi 0, %s26
      %s30 = sphi 0, %s27
      %s31 = sphi 0, %s28
      %s32 = sphi 0, %s29
      %s33 = sphi 0, %s30
      %s34 = sphi 0, %s31
      %s50 = sphi 0, %s52
      %s53 = sphi 0, %s50
      %s54 = sphi 0, %s53
      %s70 = sphi 0, %s54
      %s78 = sphi 0, %s80
      %s81 = sphi 0, %s78
      %s82 = sphi 0, %s81
      %s98 = sphi 0, %s82
      %s106 = sphi 0, %s108
      %s109 = sphi 0, %s106
      %s110 = sphi 0, %s109
      %s126 = sphi 0, %s110
      %s134 = sphi 0, %s136
      %s137 = sphi 0, %s134
      %s138 = sphi 0, %s137
      %s154 = sphi 0, %s138
    $region4: #{tpu_custom_call.1} parent=1 // loop_header_branch
      %22 = sbr.rel (%p20) target = $region8
    $region5: #{tpu_custom_call.1} parent=1 // loop_body
      %s24 = ssub.s32 %s19, 1
      %s25 = ssub.s32 %s19, 2
      %s35 = sadd.s32 1, %s28
      %p36 = scmp.ge.s32.totalorder %s35, 1
      %s37 = scalar_select %p36, 0, %s35
      %s38 = sadd.s32 1, %s27
      %s39 = scalar_select %p36, %s38, %s27
      %p40 = scmp.ge.s32.totalorder %s39, 1
      %s41 = scalar_select %p40, 0, %s39
      %s42 = sadd.s32 1, %s26
      %s43 = scalar_select %p40, %s42, %s26
      %p44 = scmp.ge.s32.totalorder %s43, 2
      %s45 = scalar_select %p44, 0, %s43
      %s46 = ssub.s32 %s26, %s45
      %s47 = ssub.s32 %s27, %s41
      %s48 = sor.u32 %s46, %s47
      %p49 = scmp.eq.s32.totalorder %s48, 0
      %s51 = sadd.s32 %s50, 1
      %s52 = scalar_select %p49, %s50, %s51
      %p55 = pneg %p49
      %p56 = scmp.eq.s32.totalorder %s19, 1
      %p57 = por %p55, %p56
      %p58 = scmp.ne.s32.totalorder %s50, %s53
      %p59 = scmp.eq.s32.totalorder %s19, 0
      %p60 = por %p58, %p59
      %p61 = scmp.ne.s32.totalorder %s50, %s53
      %p62 = scmp.eq.s32.totalorder %s24, 1
      %p63 = por %p61, %p62
      %p64 = scmp.ne.s32.totalorder %s53, %s54
      %p65 = scmp.eq.s32.totalorder %s24, 0
      %p66 = por %p64, %p65
      %p67 = scmp.ne.s32.totalorder %s53, %s54
      %p68 = scmp.eq.s32.totalorder %s25, 1
      %p69 = por %p67, %p68
      %p71 = scmp.ne.s32.totalorder %s54, %s70
      %p72 = scmp.eq.s32.totalorder %s25, 0
      %p73 = por %p71, %p72
      %s74 = ssub.s32 %s26, %s45
      %s75 = ssub.s32 %s28, %s37
      %s76 = sor.u32 %s74, %s75
      %p77 = scmp.eq.s32.totalorder %s76, 0
      %s79 = sadd.s32 %s78, 1
      %s80 = scalar_select %p77, %s78, %s79
      %p83 = pneg %p77
      %p84 = scmp.eq.s32.totalorder %s19, 1
      %p85 = por %p83, %p84
      %p86 = scmp.ne.s32.totalorder %s78, %s81
      %p87 = scmp.eq.s32.totalorder %s19, 0
      %p88 = por %p86, %p87
      %p89 = scmp.ne.s32.totalorder %s78, %s81
      %p90 = scmp.eq.s32.totalorder %s24, 1
      %p91 = por %p89, %p90
      %p92 = scmp.ne.s32.totalorder %s81, %s82
      %p93 = scmp.eq.s32.totalorder %s24, 0
      %p94 = por %p92, %p93
      %p95 = scmp.ne.s32.totalorder %s81, %s82
      %p96 = scmp.eq.s32.totalorder %s25, 1
      %p97 = por %p95, %p96
      %p99 = scmp.ne.s32.totalorder %s82, %s98
      %p100 = scmp.eq.s32.totalorder %s25, 0
      %p101 = por %p99, %p100
      %s102 = ssub.s32 %s26, %s45
      %s103 = ssub.s32 %s28, %s37
      %s104 = sor.u32 %s102, %s103
      %p105 = scmp.eq.s32.totalorder %s104, 0
      %s107 = sadd.s32 %s106, 1
      %s108 = scalar_select %p105, %s106, %s107
      %p111 = pneg %p105
      %p112 = scmp.eq.s32.totalorder %s19, 1
      %p113 = por %p111, %p112
      %p114 = scmp.ne.s32.totalorder %s106, %s109
      %p115 = scmp.eq.s32.totalorder %s19, 0
      %p116 = por %p114, %p115
      %p117 = scmp.ne.s32.totalorder %s106, %s109
      %p118 = scmp.eq.s32.totalorder %s24, 1
      %p119 = por %p117, %p118
      %p120 = scmp.ne.s32.totalorder %s109, %s110
      %p121 = scmp.eq.s32.totalorder %s24, 0
      %p122 = por %p120, %p121
      %p123 = scmp.ne.s32.totalorder %s109, %s110
      %p124 = scmp.eq.s32.totalorder %s25, 1
      %p125 = por %p123, %p124
      %p127 = scmp.ne.s32.totalorder %s110, %s126
      %p128 = scmp.eq.s32.totalorder %s25, 0
      %p129 = por %p127, %p128
      %s130 = ssub.s32 %s26, %s45
      %s131 = ssub.s32 %s27, %s41
      %s132 = sor.u32 %s130, %s131
      %p133 = scmp.eq.s32.totalorder %s132, 0
      %s135 = sadd.s32 %s134, 1
      %s136 = scalar_select %p133, %s134, %s135
      %p139 = pneg %p133
      %p140 = scmp.eq.s32.totalorder %s19, 1
      %p141 = por %p139, %p140
      %p142 = scmp.ne.s32.totalorder %s134, %s137
      %p143 = scmp.eq.s32.totalorder %s19, 0
      %p144 = por %p142, %p143
      %p145 = scmp.ne.s32.totalorder %s134, %s137
      %p146 = scmp.eq.s32.totalorder %s24, 1
      %p147 = por %p145, %p146
      %p148 = scmp.ne.s32.totalorder %s137, %s138
      %p149 = scmp.eq.s32.totalorder %s24, 0
      %p150 = por %p148, %p149
      %p151 = scmp.ne.s32.totalorder %s137, %s138
      %p152 = scmp.eq.s32.totalorder %s25, 1
      %p153 = por %p151, %p152
      %p155 = scmp.ne.s32.totalorder %s138, %s154
      %p156 = scmp.eq.s32.totalorder %s25, 0
      %p157 = por %p155, %p156
      %p158 = scmp.le.s32.totalorder 1, %s19
      %p159 = scmp.lt.s32.totalorder %s19, 3
      %p160 = pnand %p158, %p159
      %p161 = pneg %p160
      // Predicated region
      $region9: #{tpu_custom_call.1} parent=5 // pred_check
        _
      $region10: #{tpu_custom_call.1} parent=5 // pred_check_branch
        %163 = sbr.rel (%p160) target = $region12
      $region11: #{tpu_custom_call.1} parent=5 // pred_region
        %s164 = ssub.s32 %s19, 1
      $region12: #{tpu_custom_call.1} parent=5 // pred_fallthru
        _
      %p165 = scmp.lt.s32.totalorder %s19, 2
      // Predicated region
      $region13: #{tpu_custom_call.1} parent=5 // pred_check
        %p166 = pneg %p165
      $region14: #{tpu_custom_call.1} parent=5 // pred_check_branch
        %168 = sbr.rel (%p166) target = $region16
      $region15: #{tpu_custom_call.1} parent=5 // pred_region
        // Predicated region
        $region17: #{tpu_custom_call.1} parent=15 // pred_check
          %p169 = pneg %p60
        $region18: #{tpu_custom_call.1} parent=15 // pred_check_branch
          %171 = sbr.rel (%p169) target = $region20
        $region19: #{tpu_custom_call.1} parent=15 // pred_region
          %p172 = scmp.lt.s32.totalorder %s26, 1
          %s173 = scalar_select %p172, %s26, 1
          %p174 = scmp.lt.s32.totalorder %s27, 0
          %s175 = scalar_select %p174, %s27, 0
          %s176 = sadd.s32 %s175, %s173
          %s177 = smul.addr %s176, 8
          %s178 = scalar_lea.vmem %s1, %s177
        $region20: #{tpu_custom_call.1} parent=15 // pred_fallthru
          _
        // Predicated region
        $region21: #{tpu_custom_call.1} parent=15 // pred_check
          %p179 = pneg %p88
        $region22: #{tpu_custom_call.1} parent=15 // pred_check_branch
          %181 = sbr.rel (%p179) target = $region24
        $region23: #{tpu_custom_call.1} parent=15 // pred_region
          %p182 = scmp.lt.s32.totalorder %s26, 1
          %s183 = scalar_select %p182, %s26, 1
          %p184 = scmp.lt.s32.totalorder %s28, 0
          %s185 = scalar_select %p184, %s28, 0
          %s186 = smul.addr %s183, 4
          %s187 = sadd.s32 %s185, %s186
          %s188 = smul.addr %s187, 8
          %s189 = scalar_lea.vmem %s2, %s188
        $region24: #{tpu_custom_call.1} parent=15 // pred_fallthru
          _
        // Predicated region
        $region25: #{tpu_custom_call.1} parent=15 // pred_check
          %p190 = pneg %p116
        $region26: #{tpu_custom_call.1} parent=15 // pred_check_branch
          %192 = sbr.rel (%p190) target = $region28
        $region27: #{tpu_custom_call.1} parent=15 // pred_region
          %s193 = smul.u32 2, %s28
          %p194 = scmp.lt.s32.totalorder %s26, 1
          %s195 = scalar_select %p194, %s26, 1
          %p196 = scmp.lt.s32.totalorder %s193, 1
          %s197 = scalar_select %p196, %s193, 1
          %s198 = smul.addr %s195, 2
          %s199 = sadd.s32 %s197, %s198
          %s200 = smul.addr %s199, 8
          %s201 = scalar_lea.vmem %s3, %s200
          %s202 = smul.u32 2, %s28
        $region28: #{tpu_custom_call.1} parent=15 // pred_fallthru
          _
      $region16: #{tpu_custom_call.1} parent=5 // pred_fallthru
        _
      %p203 = scmp.le.s32.totalorder 1, %s19
      %p204 = scmp.lt.s32.totalorder %s19, 3
      %p205 = pnand %p203, %p204
      %p206 = pneg %p205
      // Predicated region
      $region29: #{tpu_custom_call.1} parent=5 // pred_check
        _
      $region30: #{tpu_custom_call.1} parent=5 // pred_check_branch
        %208 = sbr.rel (%p205) target = $region32
      $region31: #{tpu_custom_call.1} parent=5 // pred_region
        %s209 = ssub.s32 %s19, 1
        %p210 = scmp.lt.s32.totalorder %s29, 1
        %s211 = scalar_select %p210, %s29, 1
        %p212 = scmp.lt.s32.totalorder %s30, 0
        %s213 = scalar_select %p212, %s30, 0
        %s214 = sadd.s32 %s213, %s211
        %s215 = smul.addr %s214, 8
        %s216 = scalar_lea.vmem %s1, %s215
        %p217 = pneg %p66
        %p218 = pneg %p63
        %p219 = scmp.lt.s32.totalorder %s29, 1
        %s220 = scalar_select %p219, %s29, 1
        %p221 = scmp.lt.s32.totalorder %s31, 0
        %s222 = scalar_select %p221, %s31, 0
        %s223 = smul.addr %s220, 4
        %s224 = sadd.s32 %s222, %s223
        %s225 = smul.addr %s224, 8
        %s226 = scalar_lea.vmem %s2, %s225
        %p227 = pneg %p94
        %p228 = pneg %p91
        %s229 = smul.u32 2, %s31
        %p230 = scmp.lt.s32.totalorder %s29, 1
        %s231 = scalar_select %p230, %s29, 1
        %p232 = scmp.lt.s32.totalorder %s229, 1
        %s233 = scalar_select %p232, %s229, 1
        %s234 = smul.addr %s231, 2
        %s235 = sadd.s32 %s233, %s234
        %s236 = smul.addr %s235, 8
        %s237 = scalar_lea.vmem %s3, %s236
        %p238 = pneg %p122
        %p239 = pneg %p119
        %p240 = pneg %p150
        %p241 = pneg %p147
        %s242 = sand.u32 %s137, 1
        %s243 = scalar_lea.sflag [#allocation8], %s242
        %s244 = sand.u32 %s137, 1
        %s245 = smul.addr %s244, 8
        %s246 = scalar_lea.vmem [#allocation7], %s245
        %p247 = scmp.lt.s32.totalorder %s29, 1
        %s248 = scalar_select %p247, %s29, 1
        %p249 = scmp.lt.s32.totalorder %s30, 0
        %s250 = scalar_select %p249, %s30, 0
        %s251 = sadd.s32 %s250, %s248
        %s252 = smul.addr %s251, 8
        %s253 = scalar_lea.vmem %s1, %s252
        %p254 = scmp.lt.s32.totalorder %s29, 1
        %s255 = scalar_select %p254, %s29, 1
        %p256 = scmp.lt.s32.totalorder %s31, 0
        %s257 = scalar_select %p256, %s31, 0
        %s258 = smul.addr %s255, 4
        %s259 = sadd.s32 %s257, %s258
        %s260 = smul.addr %s259, 8
        %s261 = scalar_lea.vmem %s2, %s260
        %s262 = smul.u32 2, %s31
        %p263 = scmp.lt.s32.totalorder %s29, 1
        %s264 = scalar_select %p263, %s29, 1
        %p265 = scmp.lt.s32.totalorder %s262, 1
        %s266 = scalar_select %p265, %s262, 1
        %s267 = smul.addr %s264, 2
        %s268 = sadd.s32 %s266, %s267
        %s269 = smul.addr %s268, 8
        %s270 = scalar_lea.vmem %s3, %s269
        %s271 = smul.u32 2, %s31
        %s272 = sld [smem:[#allocation6 + %s29]]
        %v273 = vld [vmem:[%s253] sm:$0xff]
        %v274 = vld [vmem:[%s261] sm:$0xff]
        %v275 = vld [vmem:[%s261 + $0x8] sm:$0xff]
        %v276 = vld [vmem:[%s261 + $0x10] sm:$0xff]
        %v277 = vld [vmem:[%s261 + $0x18] sm:$0xff]
        %v278 = vld [vmem:[%s270] sm:$0xff]
        %v279 = vld [vmem:[%s270 + $0x8] sm:$0xff]
        %p280 = scmp.eq.s32.totalorder %s31, 0
        // Predicated region
        $region33: #{tpu_custom_call.1} parent=31 // pred_check
          %p281 = pneg %p280
        $region34: #{tpu_custom_call.1} parent=31 // pred_check_branch
          %283 = sbr.rel (%p281) target = $region36
        $region35: #{tpu_custom_call.1} parent=31 // pred_region
          %vm284 = vcmask 7168
          %285 = vst.msk [vmem:[#allocation2] sm:$0xff] %vm284, -inf
          %286 = vst.msk [vmem:[#allocation3] sm:$0xff] %vm284, 0.0
          %vm287 = vcmask 261120
          %288 = vst.msk [vmem:[#allocation4] sm:$0xff] %vm287, 0.0
        $region36: #{tpu_custom_call.1} parent=31 // pred_fallthru
          _
        %v289 = vmul.f32 %v273, 0.17677669
        %vm290 = vcmask 261120
        %v292 = vsel %vm290, %v289, 0
        %294 = vmatprep.subr.mxu0 0.0
        %295 = vmatpush1.msra.mxu0 %v274
        %296 = vmatprep.subr.mxu0 0.0
        %297 = vmatpush1.msra.mxu0 %v275
        %298 = vmatprep.subr.mxu0 0.0
        %299 = vmatpush1.msra.mxu0 %v276
        %300 = vmatprep.subr.mxu0 0.0
        %301 = vmatpush1.msra.mxu0 %v277
        %302 = vmatprep.subr.mxu0 0.0
        %303 = vmatpush1.msra.mxu0 0.0
        %304 = vmatprep.subr.mxu0 0.0
        %305 = vmatpush1.msra.mxu0 0.0
        %306 = vmatprep.subr.mxu0 0.0
        %307 = vmatpush1.msra.mxu0 0.0
        %308 = vmatprep.subr.mxu0 0.0
        %309 = vmatpush1.msra.mxu0 0.0
        %310 = vmatprep.subr.mxu0 0.0
        %311 = vmatpush1.msra.mxu0 0.0
        %312 = vmatprep.subr.mxu0 0.0
        %313 = vmatpush1.msra.mxu0 0.0
        %314 = vmatprep.subr.mxu0 0.0
        %315 = vmatpush1.msra.mxu0 0.0
        %316 = vmatprep.subr.mxu0 0.0
        %317 = vmatpush1.msra.mxu0 0.0
        %318 = vmatprep.subr.mxu0 0.0
        %319 = vmatpush1.msra.mxu0 0.0
        %320 = vmatprep.subr.mxu0 0.0
        %321 = vmatpush1.msra.mxu0 0.0
        %322 = vmatprep.subr.mxu0 0.0
        %323 = vmatpush1.msra.mxu0 0.0
        %324 = vmatprep.subr.mxu0 0.0
        %325 = vmatpush1.msra.mxu0 0.0
        %326 = vmatprep.subr.mxu0 0.0
        %327 = vmatpush1.msra.mxu0 0.0
        %328 = vmatprep.subr.mxu0 0.0
        %329 = vmatpush1.msra.mxu0 0.0
        %330 = vmatprep.subr.mxu0 0.0
        %331 = vmatpush1.msra.mxu0 0.0
        %332 = vmatprep.subr.mxu0 0.0
        %333 = vmatpush1.msra.mxu0 0.0
        %334 = vmatprep.subr.mxu0 0.0
        %335 = vmatpush1.msra.mxu0 0.0
        %336 = vmatprep.subr.mxu0 0.0
        %337 = vmatpush1.msra.mxu0 0.0
        %338 = vmatprep.subr.mxu0 0.0
        %339 = vmatpush1.msra.mxu0 0.0
        %340 = vmatprep.subr.mxu0 0.0
        %341 = vmatpush1.msra.mxu0 0.0
        %342 = vmatprep.subr.mxu0 0.0
        %343 = vmatpush1.msra.mxu0 0.0
        %344 = vmatprep.subr.mxu0 0.0
        %345 = vmatpush1.msra.mxu0 0.0
        %346 = vmatprep.subr.mxu0 0.0
        %347 = vmatpush1.msra.mxu0 0.0
        %348 = vmatprep.subr.mxu0 0.0
        %349 = vmatpush1.msra.mxu0 0.0
        %350 = vmatprep.subr.mxu0 0.0
        %351 = vmatpush1.msra.mxu0 0.0
        %352 = vmatprep.subr.mxu0 0.0
        %353 = vmatpush1.msra.mxu0 0.0
        %354 = vmatprep.subr.mxu0 0.0
        %355 = vmatpush1.msra.mxu0 0.0
        %356 = vmatprep.subr.mxu0 0.0
        %357 = vmatpush1.msra.mxu0 0.0
        %358 = vmatprep.mubr.f32.mxu0 0.0
        %359 = vmatmul.mubr.f32.gmra.mrb[0].mxu0 %v292
        %v360 = vpop.f32.mrb[0].mxu0
        %v361 = vadd.f32 0.0, %v360
        %v362 = vpop.f32.mrb[0].mxu0
        %363 = vdwg.mxu0
        %s364 = smul.u32 %s31, 16
        %v365 = vlaneseq
        %v366 = vand.u32 %v365, 127
        %v367 = vstv %s364
        %v368 = vadd.s32 %v367, %v366
        %v369 = vstv %s272
        %vm370 = vcmp.lt.s32.totalorder %v368, %v369
        %v371 = vsel %vm370, %v361, -1000000.0
        %v372 = vld [vmem:[#allocation2] sm:$0xff]
        %vm373 = vcmask 130048
        %v374 = vsel %vm373, %v371, -inf
        %375 = vmax.xlane.f32.xlu0 %v374
        %v376 = vpop.xlane.xlu0 %375
        %v377 = vmax.f32 %v372, %v376
        %v378 = vsub.f32 %v372, %v377
        %v379 = vmul.f32 %v378, 1.442695
        %v380 = vpow.pop %v379
        %382 = vset.pattern.permute.xlu0 0
        %383 = vperm.xlu0 %382, %v377
        %v384 = vpop.permute.xlu0 %383
        %v386 = vsub.f32 %v371, %v384
        %v387 = vmul.f32 %v386, 1.442695
        %v388 = vpow.pop %v387
        %v389 = vld [vmem:[#allocation3] sm:$0xff]
        %v390 = vmul.f32 %v380, %v389
        %v391 = vsel %vm373, %v388, 0.0
        %392 = vadd.xlane.f32.xlu0 %v391
        %v393 = vpop.xlane.xlu0 %392
        %v394 = vadd.f32 %v390, %v393
        %vm395 = vcmask 7168
        %396 = vst.msk [vmem:[#allocation3] sm:$0xff] %vm395, %v394
        %v397 = vld [vmem:[#allocation4] sm:$0xff]
        %399 = vset.pattern.permute.xlu0 0
        %400 = vperm.xlu0 %399, %v380
        %v401 = vpop.permute.xlu0 %400
        %v403 = vmul.f32 %v401, %v397
        %v405 = vsel %vm373, %v388, 0
        %407 = vmatprep.subr.mxu0 0.0
        %408 = vmatpush1.msra.mxu0 %v278
        %409 = vmatprep.subr.mxu0 0.0
        %410 = vmatpush1.msra.mxu0 %v279
        %411 = vmatprep.subr.mxu0 0.0
        %412 = vmatpush1.msra.mxu0 0.0
        %413 = vmatprep.subr.mxu0 0.0
        %414 = vmatpush1.msra.mxu0 0.0
        %415 = vmatprep.subr.mxu0 0.0
        %416 = vmatpush1.msra.mxu0 0.0
        %417 = vmatprep.subr.mxu0 0.0
        %418 = vmatpush1.msra.mxu0 0.0
        %419 = vmatprep.subr.mxu0 0.0
        %420 = vmatpush1.msra.mxu0 0.0
        %421 = vmatprep.subr.mxu0 0.0
        %422 = vmatpush1.msra.mxu0 0.0
        %423 = vmatprep.subr.mxu0 0.0
        %424 = vmatpush1.msra.mxu0 0.0
        %425 = vmatprep.subr.mxu0 0.0
        %426 = vmatpush1.msra.mxu0 0.0
        %427 = vmatprep.subr.mxu0 0.0
        %428 = vmatpush1.msra.mxu0 0.0
        %429 = vmatprep.subr.mxu0 0.0
        %430 = vmatpush1.msra.mxu0 0.0
        %431 = vmatprep.subr.mxu0 0.0
        %432 = vmatpush1.msra.mxu0 0.0
        %433 = vmatprep.subr.mxu0 0.0
        %434 = vmatpush1.msra.mxu0 0.0
        %435 = vmatprep.subr.mxu0 0.0
        %436 = vmatpush1.msra.mxu0 0.0
        %437 = vmatprep.subr.mxu0 0.0
        %438 = vmatpush1.msra.mxu0 0.0
        %439 = vmatprep.subr.mxu0 0.0
        %440 = vmatpush1.msra.mxu0 0.0
        %441 = vmatprep.subr.mxu0 0.0
        %442 = vmatpush1.msra.mxu0 0.0
        %443 = vmatprep.subr.mxu0 0.0
        %444 = vmatpush1.msra.mxu0 0.0
        %445 = vmatprep.subr.mxu0 0.0
        %446 = vmatpush1.msra.mxu0 0.0
        %447 = vmatprep.subr.mxu0 0.0
        %448 = vmatpush1.msra.mxu0 0.0
        %449 = vmatprep.subr.mxu0 0.0
        %450 = vmatpush1.msra.mxu0 0.0
        %451 = vmatprep.subr.mxu0 0.0
        %452 = vmatpush1.msra.mxu0 0.0
        %453 = vmatprep.subr.mxu0 0.0
        %454 = vmatpush1.msra.mxu0 0.0
        %455 = vmatprep.subr.mxu0 0.0
        %456 = vmatpush1.msra.mxu0 0.0
        %457 = vmatprep.subr.mxu0 0.0
        %458 = vmatpush1.msra.mxu0 0.0
        %459 = vmatprep.subr.mxu0 0.0
        %460 = vmatpush1.msra.mxu0 0.0
        %461 = vmatprep.subr.mxu0 0.0
        %462 = vmatpush1.msra.mxu0 0.0
        %463 = vmatprep.subr.mxu0 0.0
        %464 = vmatpush1.msra.mxu0 0.0
        %465 = vmatprep.subr.mxu0 0.0
        %466 = vmatpush1.msra.mxu0 0.0
        %467 = vmatprep.subr.mxu0 0.0
        %468 = vmatpush1.msra.mxu0 0.0
        %469 = vmatprep.subr.mxu0 0.0
        %470 = vmatpush1.msra.mxu0 0.0
        %471 = vmatprep.mubr.f32.mxu0 0.0
        %472 = vmatmul.mubr.f32.gmra.mrb[0].mxu0 %v405
        %v473 = vpop.f32.mrb[0].mxu0
        %v474 = vadd.f32 0.0, %v473
        %v475 = vpop.f32.mrb[0].mxu0
        %476 = vdwg.mxu0
        %v477 = vadd.f32 %v403, %v474
        %478 = vst.msk [vmem:[#allocation4] sm:$0xff] %vm290, %v477
        %479 = vst.msk [vmem:[#allocation2] sm:$0xff] %vm395, %v377
        // Predicated region
        $region37: #{tpu_custom_call.1} parent=31 // pred_check
          %p480 = pneg %p280
        $region38: #{tpu_custom_call.1} parent=31 // pred_check_branch
          %482 = sbr.rel (%p480) target = $region40
        $region39: #{tpu_custom_call.1} parent=31 // pred_region
          %v483 = vld [vmem:[#allocation3] sm:$0xff]
          %v484 = vrcp.pop %v483
          %v485 = vld [vmem:[#allocation4] sm:$0xff]
          %487 = vset.pattern.permute.xlu0 0
          %488 = vperm.xlu0 %487, %v484
          %v489 = vpop.permute.xlu0 %488
          %v491 = vmul.f32 %v485, %v489
          %492 = vst.msk [vmem:[%s246] sm:$0xff] %vm290, %v491
        $region40: #{tpu_custom_call.1} parent=31 // pred_fallthru
          _
        %s493 = sand.u32 %s137, 1
        %s494 = scalar_lea.sflag [#allocation8], %s493
        %s495 = sand.u32 %s137, 1
        %s496 = smul.addr %s495, 8
        %s497 = scalar_lea.vmem [#allocation7], %s496
        // Predicated region
        $region41: #{tpu_custom_call.1} parent=31 // pred_check
          %p498 = pneg %p147
        $region42: #{tpu_custom_call.1} parent=31 // pred_check_branch
          %500 = sbr.rel (%p498) target = $region44
        $region43: #{tpu_custom_call.1} parent=31 // pred_region
          %s502 = ssub.s32 128, 128
          %503 = vsyncadd %s494, %s502
          %s504 = sadd.s32 %s30, %s29
          %s505 = smul.addr %s504, 128
          %s506 = scalar_lea.hbm %s4, %s505
          %s508 = sshll.u32 %s497, 4
          %s509 = int_to_ptr.vmem [resolvable:$true] %s508
          %511 = dma.vmem_to_hbm [thread:$0]  %s509, 128, %s506, %s494
        $region44: #{tpu_custom_call.1} parent=31 // pred_fallthru
          _
      $region32: #{tpu_custom_call.1} parent=5 // pred_fallthru
        _
      %p512 = scmp.le.s32.totalorder 2, %s19
      // Predicated region
      $region45: #{tpu_custom_call.1} parent=5 // pred_check
        %p513 = pneg %p512
      $region46: #{tpu_custom_call.1} parent=5 // pred_check_branch
        %515 = sbr.rel (%p513) target = $region48
      $region47: #{tpu_custom_call.1} parent=5 // pred_region
        %s516 = ssub.s32 %s19, 2
        // Predicated region
        $region49: #{tpu_custom_call.1} parent=47 // pred_check
          %p517 = pneg %p153
        $region50: #{tpu_custom_call.1} parent=47 // pred_check_branch
          %519 = sbr.rel (%p517) target = $region52
        $region51: #{tpu_custom_call.1} parent=47 // pred_region
          %s520 = sand.u32 %s138, 1
          %s521 = scalar_lea.sflag [#allocation8], %s520
          %s522 = sand.u32 %s138, 1
          %s523 = smul.addr %s522, 8
          %s524 = scalar_lea.vmem [#allocation7], %s523
          %525 = dma.done %s521, 128
        $region52: #{tpu_custom_call.1} parent=47 // pred_fallthru
          _
      $region48: #{tpu_custom_call.1} parent=5 // pred_fallthru
        _
    $region6: #{tpu_custom_call.1} parent=1 // loop_footer
      %s23 = sadd.s32 1, %s19
    $region7: #{tpu_custom_call.1} parent=1 // loop_footer_branch
      %18 = sbr.rel target = $region3
    $region8: #{tpu_custom_call.1} parent=1 // loop_exit
      _
    %526 = vsyncpa [#allocation8], 1
    %s527 = scalar_lea.sflag [#allocation8], 1
    %528 = vsyncpa %s527, 1

</llo_original>
